<compile_context>
chip_gen: v6e
topology: v6e:2x2x1
jax: 0.10.0
libtpu: 0.0.40
codegen_flags: <defaults>
</compile_context>

<pallas_src>
import functools

import jax
import jax.numpy as jnp
import numpy as np
from jax.experimental import pallas as pl
from jax.experimental.pallas import tpu as pltpu

_COS_EPS = 1e-6     # nn.CosineSimilarity eps
_CLAMP_MIN = 1e-12  # dist.clamp(min=...)
# dist.clamp(max=1e12) is provably inactive (dist = 1 - cos in [0, ~2]) and is
# dropped from the kernel.


def _center_loss_kernel(labels_ref, x_ref, centers_hbm, loss_ref,
                        gathered, sem, *, batch_size, num_classes):
    # --- Issue the B gather DMAs first (one labeled `centers` row each). ---
    # Unrolled at trace time (B is small).  All copies share ONE scalar DMA
    # semaphore: every copy is the same size, so each wait below drains exactly
    # one row's worth regardless of completion order, and semaphore / code-size
    # cost stays O(1) in B.
    # TODO(synk): for large B, switch this to a lax.fori_loop over a rotating
    # sem/buffer ring (P4) instead of trace-time unrolling.
    copies = []
    for i in range(batch_size):
        lab = labels_ref[i]                              # scalar i32 from SMEM
        # Defensive clamp: an out-of-range label would otherwise turn into an
        # out-of-bounds HBM DMA and hard-fault the chip.
        lab = jnp.minimum(jnp.maximum(lab, 0), num_classes - 1)
        copies.append(pltpu.make_async_copy(
            centers_hbm.at[pl.ds(lab, 1)],               # (1, D) row in HBM
            gathered.at[pl.ds(i, 1)],                    # (1, D) VMEM row
            sem,
        ))
    for cp in copies:
        cp.start()

    # --- x-only work overlaps the gather-DMA latency (hoisted above waits). ---
    x = x_ref[...].astype(jnp.float32)                   # (B, D)
    w1 = jnp.sum(x * x, axis=-1, keepdims=True)          # (B, 1)  ||x||^2

    for cp in copies:
        cp.wait()

    # Cast only the gathered B*D elements in-kernel; the full `centers` table
    # is never cast or streamed.
    c = gathered[...].astype(jnp.float32)                # (B, D)

    # Row-wise cosine similarity with nn.CosineSimilarity semantics:
    #   cos = <x, c> / max(||x||*||c||, eps)
    #       = <x, c> * rsqrt(max(||x||^2 * ||c||^2, eps^2))
    # rsqrt lowers to the EUP slot instead of a VPU divide.
    w12 = jnp.sum(x * c, axis=-1, keepdims=True)         # (B, 1)
    w2 = jnp.sum(c * c, axis=-1, keepdims=True)          # (B, 1)
    cos = w12 * jax.lax.rsqrt(jnp.maximum(w1 * w2, _COS_EPS * _COS_EPS))

    matched = jnp.maximum(1.0 - cos, _CLAMP_MIN)         # clamp(min=1e-12)

    # The B*(N-1) masked-out entries of the virtual (B, N) matrix each
    # contribute exactly clamp_min; fold that constant and the 1/B
    # normalization into compile-time scalars (no divide on the serial tail).
    inv_b = jnp.float32(1.0 / batch_size)
    masked_const = jnp.float32(_CLAMP_MIN * (num_classes - 1))
    total = jnp.sum(matched, axis=0, keepdims=True)      # (1, 1)
    # Kept as a (1, 1) VMEM output: the alternative (scalar store to an SMEM
    # output) needs a vreg->sreg move for a 4-byte result and is not worth the
    # lowering risk on this launch/DMA-latency-bound kernel.
    loss_ref[...] = total * inv_b + masked_const


def center_loss(x, centers, labels):
    """Pallas implementation of CenterLoss.forward.

    x:       (B, D) features (cast to f32 in-kernel)
    centers: (N, D) class centers (gathered rows cast in-kernel)
    labels:  (B,)   int class labels in [0, N)
    returns: scalar float32 loss
    """
    B, D = x.shape
    N, D2 = centers.shape
    assert D == D2

    kernel = functools.partial(_center_loss_kernel,
                               batch_size=B, num_classes=N)
    out = pl.pallas_call(
        kernel,
        out_shape=jax.ShapeDtypeStruct((1, 1), jnp.float32),
        grid_spec=pltpu.PrefetchScalarGridSpec(
            num_scalar_prefetch=1,                    # labels -> SMEM
            grid=(1,),
            in_specs=[
                pl.BlockSpec((B, D), lambda i, lab: (0, 0)),   # x: full block
                pl.BlockSpec(memory_space=pl.ANY),             # centers: HBM
            ],
            out_specs=pl.BlockSpec((1, 1), lambda i, lab: (0, 0)),
            scratch_shapes=[
                pltpu.VMEM((B, D), centers.dtype),   # gathered labeled rows
                pltpu.SemaphoreType.DMA(()),         # one shared gather sem
            ],
        ),
        compiler_params=pltpu.CompilerParams(
            dimension_semantics=("arbitrary",),
        ),
    )(labels.astype(jnp.int32), x, centers)
    return out[0, 0]


def _reference_center_loss(x, centers, labels):
    """Pure-JAX reference mirroring the PyTorch forward (full (B, N) matrix)."""
    x = x.astype(jnp.float32)
    centers = centers.astype(jnp.float32)
    B, D = x.shape
    N, _ = centers.shape
    w12 = jnp.dot(x, centers.T, precision=jax.lax.Precision.HIGHEST)
    w1 = jnp.sum(x * x, axis=-1, keepdims=True)
    w2 = jnp.sum(centers * centers, axis=-1, keepdims=True)
    # PyTorch cosine_similarity: w12 / sqrt(clamp_min(w1*w2, eps^2))
    cos = w12 / jnp.sqrt(jnp.maximum(w1 * w2.T, _COS_EPS * _COS_EPS))
    distmat = 1.0 - cos
    mask = (labels[:, None] == jnp.arange(N)[None, :]).astype(jnp.float32)
    dist = distmat * mask
    return jnp.clip(dist, _CLAMP_MIN, 1e12).sum() / B


if __name__ == "__main__":
    # Module defaults: num_classes=1255, feat_dim=256; small batch.  The gather
    # rewrite imposes no divisibility constraint on num_classes.
    batch = 8
    feat_dim = 256
    num_classes = 1255

    key = jax.random.PRNGKey(0)
    kx, kc, kl = jax.random.split(key, 3)

    x = jax.random.normal(kx, (batch, feat_dim), dtype=jnp.float32)
    # nn.init.normal_(centers, mean=0, std=1) — deterministic synthetic init.
    centers = jax.random.normal(kc, (num_classes, feat_dim), dtype=jnp.float32)
    labels = jax.random.randint(kl, (batch,), 0, num_classes, dtype=jnp.int32)

    loss = jax.block_until_ready(center_loss(x, centers, labels))
    ref = jax.block_until_ready(_reference_center_loss(x, centers, labels))

    assert np.allclose(np.asarray(loss), np.asarray(ref),
                       rtol=1e-5, atol=1e-6), (loss, ref)
    print("KERNEL_OK")
</pallas_src>

<mosaic_0001>
module attributes {stable_mosaic.version = 11 : i64} {
  func.func @_center_loss_kernel(%arg0: i32, %arg1: memref<8xi32, #tpu.memory_space<smem>>, %arg2: memref<8x256xf32, #tpu.memory_space<vmem>>, %arg3: memref<1255x256xf32, #tpu.memory_space<any>>, %arg4: memref<1x1xf32, #tpu.memory_space<vmem>>, %arg5: memref<8x256xf32, #tpu.memory_space<vmem>>, %arg6: memref<!tpu.dma_semaphore, #tpu.memory_space<semaphore_mem>>) attributes {dimension_semantics = [#tpu.dimension_semantics<arbitrary>], iteration_bounds = array<i64: 1>, scalar_prefetch = 1 : i64, scratch_operands = 2 : i64, tpu.core_type = #tpu.core_type<tc>, window_params = [{pipeline_mode = #tpu.pipeline_mode<synchronous>, transform_indices = @transform_0, window_bounds = array<i64: 8, 256>}, {}, {pipeline_mode = #tpu.pipeline_mode<synchronous>, transform_indices = @transform_2, window_bounds = array<i64: 1, 1>}]} {
    %c0 = arith.constant 0 : index
    %0 = memref.load %arg1[%c0] : memref<8xi32, #tpu.memory_space<smem>>
    %c0_i32 = arith.constant 0 : i32
    %1 = arith.maxsi %0, %c0_i32 : i32
    %c1254_i32 = arith.constant 1254 : i32
    %2 = arith.minsi %1, %c1254_i32 : i32
    %c1 = arith.constant 1 : index
    %3 = memref.load %arg1[%c1] : memref<8xi32, #tpu.memory_space<smem>>
    %c0_i32_0 = arith.constant 0 : i32
    %4 = arith.maxsi %3, %c0_i32_0 : i32
    %c1254_i32_1 = arith.constant 1254 : i32
    %5 = arith.minsi %4, %c1254_i32_1 : i32
    %c2 = arith.constant 2 : index
    %6 = memref.load %arg1[%c2] : memref<8xi32, #tpu.memory_space<smem>>
    %c0_i32_2 = arith.constant 0 : i32
    %7 = arith.maxsi %6, %c0_i32_2 : i32
    %c1254_i32_3 = arith.constant 1254 : i32
    %8 = arith.minsi %7, %c1254_i32_3 : i32
    %c3 = arith.constant 3 : index
    %9 = memref.load %arg1[%c3] : memref<8xi32, #tpu.memory_space<smem>>
    %c0_i32_4 = arith.constant 0 : i32
    %10 = arith.maxsi %9, %c0_i32_4 : i32
    %c1254_i32_5 = arith.constant 1254 : i32
    %11 = arith.minsi %10, %c1254_i32_5 : i32
    %c4 = arith.constant 4 : index
    %12 = memref.load %arg1[%c4] : memref<8xi32, #tpu.memory_space<smem>>
    %c0_i32_6 = arith.constant 0 : i32
    %13 = arith.maxsi %12, %c0_i32_6 : i32
    %c1254_i32_7 = arith.constant 1254 : i32
    %14 = arith.minsi %13, %c1254_i32_7 : i32
    %c5 = arith.constant 5 : index
    %15 = memref.load %arg1[%c5] : memref<8xi32, #tpu.memory_space<smem>>
    %c0_i32_8 = arith.constant 0 : i32
    %16 = arith.maxsi %15, %c0_i32_8 : i32
    %c1254_i32_9 = arith.constant 1254 : i32
    %17 = arith.minsi %16, %c1254_i32_9 : i32
    %c6 = arith.constant 6 : index
    %18 = memref.load %arg1[%c6] : memref<8xi32, #tpu.memory_space<smem>>
    %c0_i32_10 = arith.constant 0 : i32
    %19 = arith.maxsi %18, %c0_i32_10 : i32
    %c1254_i32_11 = arith.constant 1254 : i32
    %20 = arith.minsi %19, %c1254_i32_11 : i32
    %c7 = arith.constant 7 : index
    %21 = memref.load %arg1[%c7] : memref<8xi32, #tpu.memory_space<smem>>
    %c0_i32_12 = arith.constant 0 : i32
    %22 = arith.maxsi %21, %c0_i32_12 : i32
    %c1254_i32_13 = arith.constant 1254 : i32
    %23 = arith.minsi %22, %c1254_i32_13 : i32
    %c0_i32_14 = arith.constant 0 : i32
    %24 = tpu.memref_slice %arg3[%2, %c0_i32_14] : memref<1255x256xf32, #tpu.memory_space<any>> -> memref<1x256xf32, #tpu.memory_space<any>>
    %c0_i32_15 = arith.constant 0 : i32
    %c0_i32_16 = arith.constant 0 : i32
    %25 = tpu.memref_slice %arg5[%c0_i32_15, %c0_i32_16] : memref<8x256xf32, #tpu.memory_space<vmem>> -> memref<1x256xf32, #tpu.memory_space<vmem>>
    tpu.enqueue_dma source(%24 : memref<1x256xf32, #tpu.memory_space<any>>) target(%25 : memref<1x256xf32, #tpu.memory_space<vmem>>) target_semaphore(%arg6 : memref<!tpu.dma_semaphore, #tpu.memory_space<semaphore_mem>>)
    %c0_i32_17 = arith.constant 0 : i32
    %26 = tpu.memref_slice %arg3[%5, %c0_i32_17] : memref<1255x256xf32, #tpu.memory_space<any>> -> memref<1x256xf32, #tpu.memory_space<any>>
    %c1_i32 = arith.constant 1 : i32
    %c0_i32_18 = arith.constant 0 : i32
    %27 = tpu.memref_slice %arg5[%c1_i32, %c0_i32_18] : memref<8x256xf32, #tpu.memory_space<vmem>> -> memref<1x256xf32, #tpu.memory_space<vmem>>
    tpu.enqueue_dma source(%26 : memref<1x256xf32, #tpu.memory_space<any>>) target(%27 : memref<1x256xf32, #tpu.memory_space<vmem>>) target_semaphore(%arg6 : memref<!tpu.dma_semaphore, #tpu.memory_space<semaphore_mem>>)
    %c0_i32_19 = arith.constant 0 : i32
    %28 = tpu.memref_slice %arg3[%8, %c0_i32_19] : memref<1255x256xf32, #tpu.memory_space<any>> -> memref<1x256xf32, #tpu.memory_space<any>>
    %c2_i32 = arith.constant 2 : i32
    %c0_i32_20 = arith.constant 0 : i32
    %29 = tpu.memref_slice %arg5[%c2_i32, %c0_i32_20] : memref<8x256xf32, #tpu.memory_space<vmem>> -> memref<1x256xf32, #tpu.memory_space<vmem>>
    tpu.enqueue_dma source(%28 : memref<1x256xf32, #tpu.memory_space<any>>) target(%29 : memref<1x256xf32, #tpu.memory_space<vmem>>) target_semaphore(%arg6 : memref<!tpu.dma_semaphore, #tpu.memory_space<semaphore_mem>>)
    %c0_i32_21 = arith.constant 0 : i32
    %30 = tpu.memref_slice %arg3[%11, %c0_i32_21] : memref<1255x256xf32, #tpu.memory_space<any>> -> memref<1x256xf32, #tpu.memory_space<any>>
    %c3_i32 = arith.constant 3 : i32
    %c0_i32_22 = arith.constant 0 : i32
    %31 = tpu.memref_slice %arg5[%c3_i32, %c0_i32_22] : memref<8x256xf32, #tpu.memory_space<vmem>> -> memref<1x256xf32, #tpu.memory_space<vmem>>
    tpu.enqueue_dma source(%30 : memref<1x256xf32, #tpu.memory_space<any>>) target(%31 : memref<1x256xf32, #tpu.memory_space<vmem>>) target_semaphore(%arg6 : memref<!tpu.dma_semaphore, #tpu.memory_space<semaphore_mem>>)
    %c0_i32_23 = arith.constant 0 : i32
    %32 = tpu.memref_slice %arg3[%14, %c0_i32_23] : memref<1255x256xf32, #tpu.memory_space<any>> -> memref<1x256xf32, #tpu.memory_space<any>>
    %c4_i32 = arith.constant 4 : i32
    %c0_i32_24 = arith.constant 0 : i32
    %33 = tpu.memref_slice %arg5[%c4_i32, %c0_i32_24] : memref<8x256xf32, #tpu.memory_space<vmem>> -> memref<1x256xf32, #tpu.memory_space<vmem>>
    tpu.enqueue_dma source(%32 : memref<1x256xf32, #tpu.memory_space<any>>) target(%33 : memref<1x256xf32, #tpu.memory_space<vmem>>) target_semaphore(%arg6 : memref<!tpu.dma_semaphore, #tpu.memory_space<semaphore_mem>>)
    %c0_i32_25 = arith.constant 0 : i32
    %34 = tpu.memref_slice %arg3[%17, %c0_i32_25] : memref<1255x256xf32, #tpu.memory_space<any>> -> memref<1x256xf32, #tpu.memory_space<any>>
    %c5_i32 = arith.constant 5 : i32
    %c0_i32_26 = arith.constant 0 : i32
    %35 = tpu.memref_slice %arg5[%c5_i32, %c0_i32_26] : memref<8x256xf32, #tpu.memory_space<vmem>> -> memref<1x256xf32, #tpu.memory_space<vmem>>
    tpu.enqueue_dma source(%34 : memref<1x256xf32, #tpu.memory_space<any>>) target(%35 : memref<1x256xf32, #tpu.memory_space<vmem>>) target_semaphore(%arg6 : memref<!tpu.dma_semaphore, #tpu.memory_space<semaphore_mem>>)
    %c0_i32_27 = arith.constant 0 : i32
    %36 = tpu.memref_slice %arg3[%20, %c0_i32_27] : memref<1255x256xf32, #tpu.memory_space<any>> -> memref<1x256xf32, #tpu.memory_space<any>>
    %c6_i32 = arith.constant 6 : i32
    %c0_i32_28 = arith.constant 0 : i32
    %37 = tpu.memref_slice %arg5[%c6_i32, %c0_i32_28] : memref<8x256xf32, #tpu.memory_space<vmem>> -> memref<1x256xf32, #tpu.memory_space<vmem>>
    tpu.enqueue_dma source(%36 : memref<1x256xf32, #tpu.memory_space<any>>) target(%37 : memref<1x256xf32, #tpu.memory_space<vmem>>) target_semaphore(%arg6 : memref<!tpu.dma_semaphore, #tpu.memory_space<semaphore_mem>>)
    %c0_i32_29 = arith.constant 0 : i32
    %38 = tpu.memref_slice %arg3[%23, %c0_i32_29] : memref<1255x256xf32, #tpu.memory_space<any>> -> memref<1x256xf32, #tpu.memory_space<any>>
    %c7_i32 = arith.constant 7 : i32
    %c0_i32_30 = arith.constant 0 : i32
    %39 = tpu.memref_slice %arg5[%c7_i32, %c0_i32_30] : memref<8x256xf32, #tpu.memory_space<vmem>> -> memref<1x256xf32, #tpu.memory_space<vmem>>
    tpu.enqueue_dma source(%38 : memref<1x256xf32, #tpu.memory_space<any>>) target(%39 : memref<1x256xf32, #tpu.memory_space<vmem>>) target_semaphore(%arg6 : memref<!tpu.dma_semaphore, #tpu.memory_space<semaphore_mem>>)
    %c0_31 = arith.constant 0 : index
    %c0_32 = arith.constant 0 : index
    %40 = vector.load %arg2[%c0_31, %c0_32] : memref<8x256xf32, #tpu.memory_space<vmem>>, vector<8x256xf32>
    %41 = arith.mulf %40, %40 : vector<8x256xf32>
    %cst = arith.constant dense<0.000000e+00> : vector<8xf32>
    %42 = vector.multi_reduction <add>, %41, %cst [1] : vector<8x256xf32> to vector<8xf32>
    %43 = vector.shape_cast %42 : vector<8xf32> to vector<8x1xf32>
    %c0_i32_33 = arith.constant 0 : i32
    %44 = tpu.memref_slice %arg3[%2, %c0_i32_33] : memref<1255x256xf32, #tpu.memory_space<any>> -> memref<1x256xf32, #tpu.memory_space<any>>
    %c0_i32_34 = arith.constant 0 : i32
    %c0_i32_35 = arith.constant 0 : i32
    %45 = tpu.memref_slice %arg5[%c0_i32_34, %c0_i32_35] : memref<8x256xf32, #tpu.memory_space<vmem>> -> memref<1x256xf32, #tpu.memory_space<vmem>>
    tpu.wait_dma2 semaphore(%arg6 : memref<!tpu.dma_semaphore, #tpu.memory_space<semaphore_mem>>) src(%44 : memref<1x256xf32, #tpu.memory_space<any>>) dst(%45 : memref<1x256xf32, #tpu.memory_space<vmem>>)
    %c0_i32_36 = arith.constant 0 : i32
    %46 = tpu.memref_slice %arg3[%5, %c0_i32_36] : memref<1255x256xf32, #tpu.memory_space<any>> -> memref<1x256xf32, #tpu.memory_space<any>>
    %c1_i32_37 = arith.constant 1 : i32
    %c0_i32_38 = arith.constant 0 : i32
    %47 = tpu.memref_slice %arg5[%c1_i32_37, %c0_i32_38] : memref<8x256xf32, #tpu.memory_space<vmem>> -> memref<1x256xf32, #tpu.memory_space<vmem>>
    tpu.wait_dma2 semaphore(%arg6 : memref<!tpu.dma_semaphore, #tpu.memory_space<semaphore_mem>>) src(%46 : memref<1x256xf32, #tpu.memory_space<any>>) dst(%47 : memref<1x256xf32, #tpu.memory_space<vmem>>)
    %c0_i32_39 = arith.constant 0 : i32
    %48 = tpu.memref_slice %arg3[%8, %c0_i32_39] : memref<1255x256xf32, #tpu.memory_space<any>> -> memref<1x256xf32, #tpu.memory_space<any>>
    %c2_i32_40 = arith.constant 2 : i32
    %c0_i32_41 = arith.constant 0 : i32
    %49 = tpu.memref_slice %arg5[%c2_i32_40, %c0_i32_41] : memref<8x256xf32, #tpu.memory_space<vmem>> -> memref<1x256xf32, #tpu.memory_space<vmem>>
    tpu.wait_dma2 semaphore(%arg6 : memref<!tpu.dma_semaphore, #tpu.memory_space<semaphore_mem>>) src(%48 : memref<1x256xf32, #tpu.memory_space<any>>) dst(%49 : memref<1x256xf32, #tpu.memory_space<vmem>>)
    %c0_i32_42 = arith.constant 0 : i32
    %50 = tpu.memref_slice %arg3[%11, %c0_i32_42] : memref<1255x256xf32, #tpu.memory_space<any>> -> memref<1x256xf32, #tpu.memory_space<any>>
    %c3_i32_43 = arith.constant 3 : i32
    %c0_i32_44 = arith.constant 0 : i32
    %51 = tpu.memref_slice %arg5[%c3_i32_43, %c0_i32_44] : memref<8x256xf32, #tpu.memory_space<vmem>> -> memref<1x256xf32, #tpu.memory_space<vmem>>
    tpu.wait_dma2 semaphore(%arg6 : memref<!tpu.dma_semaphore, #tpu.memory_space<semaphore_mem>>) src(%50 : memref<1x256xf32, #tpu.memory_space<any>>) dst(%51 : memref<1x256xf32, #tpu.memory_space<vmem>>)
    %c0_i32_45 = arith.constant 0 : i32
    %52 = tpu.memref_slice %arg3[%14, %c0_i32_45] : memref<1255x256xf32, #tpu.memory_space<any>> -> memref<1x256xf32, #tpu.memory_space<any>>
    %c4_i32_46 = arith.constant 4 : i32
    %c0_i32_47 = arith.constant 0 : i32
    %53 = tpu.memref_slice %arg5[%c4_i32_46, %c0_i32_47] : memref<8x256xf32, #tpu.memory_space<vmem>> -> memref<1x256xf32, #tpu.memory_space<vmem>>
    tpu.wait_dma2 semaphore(%arg6 : memref<!tpu.dma_semaphore, #tpu.memory_space<semaphore_mem>>) src(%52 : memref<1x256xf32, #tpu.memory_space<any>>) dst(%53 : memref<1x256xf32, #tpu.memory_space<vmem>>)
    %c0_i32_48 = arith.constant 0 : i32
    %54 = tpu.memref_slice %arg3[%17, %c0_i32_48] : memref<1255x256xf32, #tpu.memory_space<any>> -> memref<1x256xf32, #tpu.memory_space<any>>
    %c5_i32_49 = arith.constant 5 : i32
    %c0_i32_50 = arith.constant 0 : i32
    %55 = tpu.memref_slice %arg5[%c5_i32_49, %c0_i32_50] : memref<8x256xf32, #tpu.memory_space<vmem>> -> memref<1x256xf32, #tpu.memory_space<vmem>>
    tpu.wait_dma2 semaphore(%arg6 : memref<!tpu.dma_semaphore, #tpu.memory_space<semaphore_mem>>) src(%54 : memref<1x256xf32, #tpu.memory_space<any>>) dst(%55 : memref<1x256xf32, #tpu.memory_space<vmem>>)
    %c0_i32_51 = arith.constant 0 : i32
    %56 = tpu.memref_slice %arg3[%20, %c0_i32_51] : memref<1255x256xf32, #tpu.memory_space<any>> -> memref<1x256xf32, #tpu.memory_space<any>>
    %c6_i32_52 = arith.constant 6 : i32
    %c0_i32_53 = arith.constant 0 : i32
    %57 = tpu.memref_slice %arg5[%c6_i32_52, %c0_i32_53] : memref<8x256xf32, #tpu.memory_space<vmem>> -> memref<1x256xf32, #tpu.memory_space<vmem>>
    tpu.wait_dma2 semaphore(%arg6 : memref<!tpu.dma_semaphore, #tpu.memory_space<semaphore_mem>>) src(%56 : memref<1x256xf32, #tpu.memory_space<any>>) dst(%57 : memref<1x256xf32, #tpu.memory_space<vmem>>)
    %c0_i32_54 = arith.constant 0 : i32
    %58 = tpu.memref_slice %arg3[%23, %c0_i32_54] : memref<1255x256xf32, #tpu.memory_space<any>> -> memref<1x256xf32, #tpu.memory_space<any>>
    %c7_i32_55 = arith.constant 7 : i32
    %c0_i32_56 = arith.constant 0 : i32
    %59 = tpu.memref_slice %arg5[%c7_i32_55, %c0_i32_56] : memref<8x256xf32, #tpu.memory_space<vmem>> -> memref<1x256xf32, #tpu.memory_space<vmem>>
    tpu.wait_dma2 semaphore(%arg6 : memref<!tpu.dma_semaphore, #tpu.memory_space<semaphore_mem>>) src(%58 : memref<1x256xf32, #tpu.memory_space<any>>) dst(%59 : memref<1x256xf32, #tpu.memory_space<vmem>>)
    %c0_57 = arith.constant 0 : index
    %c0_58 = arith.constant 0 : index
    %60 = vector.load %arg5[%c0_57, %c0_58] : memref<8x256xf32, #tpu.memory_space<vmem>>, vector<8x256xf32>
    %61 = arith.mulf %40, %60 : vector<8x256xf32>
    %cst_59 = arith.constant dense<0.000000e+00> : vector<8xf32>
    %62 = vector.multi_reduction <add>, %61, %cst_59 [1] : vector<8x256xf32> to vector<8xf32>
    %63 = vector.shape_cast %62 : vector<8xf32> to vector<8x1xf32>
    %64 = arith.mulf %60, %60 : vector<8x256xf32>
    %cst_60 = arith.constant dense<0.000000e+00> : vector<8xf32>
    %65 = vector.multi_reduction <add>, %64, %cst_60 [1] : vector<8x256xf32> to vector<8xf32>
    %66 = vector.shape_cast %65 : vector<8xf32> to vector<8x1xf32>
    %67 = arith.mulf %43, %66 : vector<8x1xf32>
    %cst_61 = arith.constant 9.99999996E-13 : f32
    %68 = vector.broadcast %cst_61 : f32 to vector<8x1xf32>
    %69 = arith.maximumf %67, %68 : vector<8x1xf32>
    %70 = math.rsqrt %69 : vector<8x1xf32>
    %71 = arith.mulf %63, %70 : vector<8x1xf32>
    %cst_62 = arith.constant 1.000000e+00 : f32
    %72 = vector.broadcast %cst_62 : f32 to vector<8x1xf32>
    %73 = arith.subf %72, %71 : vector<8x1xf32>
    %cst_63 = arith.constant 9.99999996E-13 : f32
    %74 = vector.broadcast %cst_63 : f32 to vector<8x1xf32>
    %75 = arith.maximumf %73, %74 : vector<8x1xf32>
    %cst_64 = arith.constant dense<0.000000e+00> : vector<1xf32>
    %76 = vector.multi_reduction <add>, %75, %cst_64 [0] : vector<8x1xf32> to vector<1xf32>
    %77 = vector.shape_cast %76 : vector<1xf32> to vector<1x1xf32>
    %cst_65 = arith.constant 1.250000e-01 : f32
    %78 = vector.broadcast %cst_65 : f32 to vector<1x1xf32>
    %79 = arith.mulf %77, %78 : vector<1x1xf32>
    %cst_66 = arith.constant 1.254000e-09 : f32
    %80 = vector.broadcast %cst_66 : f32 to vector<1x1xf32>
    %81 = arith.addf %79, %80 : vector<1x1xf32>
    %c0_67 = arith.constant 0 : index
    %c0_68 = arith.constant 0 : index
    %82 = vector.load %arg4[%c0_67, %c0_68] : memref<1x1xf32, #tpu.memory_space<vmem>>, vector<1x1xf32>
    tpu.vector_store %arg4[%c0_67, %c0_68], %81 {strides = array<i32>} : memref<1x1xf32, #tpu.memory_space<vmem>>, vector<1x1xf32>,
    return
  }
  func.func @transform_0(%arg0: i32, %arg1: memref<8xi32, #tpu.memory_space<smem>>) -> (i32, i32) {
    %c0_i32 = arith.constant 0 : i32
    %c0_i32_0 = arith.constant 0 : i32
    %c0_i32_1 = arith.constant 0 : i32
    return %c0_i32, %c0_i32_0 : i32, i32
  }
  func.func @transform_2(%arg0: i32, %arg1: memref<8xi32, #tpu.memory_space<smem>>) -> (i32, i32) {
    %c0_i32 = arith.constant 0 : i32
    %c0_i32_0 = arith.constant 0 : i32
    %c0_i32_1 = arith.constant 0 : i32
    return %c0_i32, %c0_i32_0 : i32, i32
  }
}

</mosaic_0001>

<llo_original>
// kernel: tpu_custom_call.1
$region0: #{tpu_custom_call.1}
  #allocation0 [shape = 'u32[]', space=smem, size = 0x4, offset = 0x4, fixed_abs, tag = 'smem constant byte address 0x4 - core index']
  #allocation1 [shape = 'u32[144,128]{1,0:T(1,128)}', space=vmem, size = 0x12000, scoped, tag = 'internal scratch']
  #allocation2 [shape = 'f32[8,256]{1,0:T(8,128)}', space=vmem, size = 0x2000, scoped, tag = 'scratch operand']
  #allocation3 [shape = 's32[1]{0}', space=sflag, size = 0x4, scoped, tag = 'scratch operand']
  #allocation4 [shape = 's32[1]{0}', space=sflag, size = 0x4, scoped, tag = 'scoped memory for tpu_custom_call.1']
  #allocation5 [shape = 'u8[512]{0}', space=smem, size = 0x200, scoped, tag = 'prefetched SMEM operand 0']
  #allocation10 [shape = 's32[]', space=sflag, size = 0x4, offset = 0, fixed_abs, tag = 'sflag constant byte address 0x0 - dummy sync flag']
  #allocation11 [shape = 's32[]', space=sflag, size = 0x4, offset = 0, fixed_abs, tag = 'sflag constant byte address 0x0 - dummy sync flag']
  #allocation12 [shape = 's32[]', space=sflag, size = 0x4, offset = 0, fixed_abs, tag = 'sflag constant byte address 0x0 - dummy sync flag']
  #allocation13 [shape = 's32[]', space=sflag, size = 0x4, offset = 0, fixed_abs, tag = 'sflag constant byte address 0x0 - dummy sync flag']
  #allocation14 [shape = 's32[]', space=sflag, size = 0x4, offset = 0, fixed_abs, tag = 'sflag constant byte address 0x0 - dummy sync flag']
  #allocation15 [shape = 's32[]', space=sflag, size = 0x4, offset = 0, fixed_abs, tag = 'sflag constant byte address 0x0 - dummy sync flag']
  #allocation16 [shape = 's32[]', space=sflag, size = 0x4, offset = 0, fixed_abs, tag = 'sflag constant byte address 0x0 - dummy sync flag']
  #allocation17 [shape = 's32[]', space=sflag, size = 0x4, offset = 0, fixed_abs, tag = 'sflag constant byte address 0x0 - dummy sync flag']
  %s0 = inlined_call_operand.hbm [shape: s32[8], index: 0, kind: input, shape index: {}]
  %s1 = inlined_call_operand.hbm [shape: f32[8,256], index: 1, kind: input, shape index: {}]
  %s2 = inlined_call_operand.hbm [shape: f32[1255,256], index: 2, kind: input, shape index: {}]
  %s3 = inlined_call_operand.hbm [shape: f32[1,1], index: 3, kind: output, shape index: {}]
  %s4 = sld [smem:[#allocation0]]
  $region18: #{tpu_custom_call.1} parent=0
    _
  %s6 = ssub.s32 1, %s4
  %s7 = scalar_select 0, %s6, %s4
  %9 = dma.hbm_to_smem %s0, 16, [#allocation5], [#allocation4]
  %10 = dma.done [#allocation4], 16
  %11 = sfence
  $region1: #{tpu_custom_call.1} parent=0
    #allocation6 [shape = 'u8[8192]{0}', space=vmem, size = 0x2000, scoped, tag = 'input window, operand 1, single buffered']
    #allocation7 [shape = 's32[1]{0}', space=sflag, size = 0x4, scoped, tag = 'scoped memory for tpu_custom_call.1']
    #allocation8 [shape = 's32[1]{0}', space=sflag, size = 0x4, scoped, tag = 'scoped memory for tpu_custom_call.1']
    #allocation9 [shape = 'u8[512]{0}', space=vmem, size = 0x400, scoped, tag = 'output window, operand 0, single buffered']
    %12 = vsyncpa [#allocation7], 0
    %13 = vsyncpa [#allocation8], 0
    // Predicated region
    $region2: #{tpu_custom_call.1} parent=1 // pred_check
      _
    $region3: #{tpu_custom_call.1} parent=1 // pred_check_branch
      %15 = sbr.rel (0) target = $region5
    $region4: #{tpu_custom_call.1} parent=1 // pred_region
      %s17 = ssub.s32 256, 256
      %18 = vsyncadd [#allocation7], %s17
      %s20 = sshll.u32 [#allocation6], 4
      %s21 = int_to_ptr.vmem [resolvable:$true] %s20
      %23 = dma.hbm_to_vmem [thread:$0]  %s1, 256, %s21, [#allocation7]
    $region5: #{tpu_custom_call.1} parent=1 // pred_fallthru
      _
    // Predicated region
    $region6: #{tpu_custom_call.1} parent=1 // pred_check
      _
    $region7: #{tpu_custom_call.1} parent=1 // pred_check_branch
      %25 = sbr.rel (0) target = $region9
    $region8: #{tpu_custom_call.1} parent=1 // pred_region
      %26 = dma.done [#allocation7], 256
    $region9: #{tpu_custom_call.1} parent=1 // pred_fallthru
      _
    %s27 = sld [smem:[#allocation5]]
    %p28 = scmp.gt.s32.totalorder %s27, 0
    %s29 = scalar_select %p28, %s27, 0
    %p30 = scmp.lt.s32.totalorder %s29, 1254
    %s31 = scalar_select %p30, %s29, 1254
    %s32 = sld [smem:[#allocation5 + $0x1]]
    %p33 = scmp.gt.s32.totalorder %s32, 0
    %s34 = scalar_select %p33, %s32, 0
    %p35 = scmp.lt.s32.totalorder %s34, 1254
    %s36 = scalar_select %p35, %s34, 1254
    %s37 = sld [smem:[#allocation5 + $0x2]]
    %p38 = scmp.gt.s32.totalorder %s37, 0
    %s39 = scalar_select %p38, %s37, 0
    %p40 = scmp.lt.s32.totalorder %s39, 1254
    %s41 = scalar_select %p40, %s39, 1254
    %s42 = sld [smem:[#allocation5 + $0x3]]
    %p43 = scmp.gt.s32.totalorder %s42, 0
    %s44 = scalar_select %p43, %s42, 0
    %p45 = scmp.lt.s32.totalorder %s44, 1254
    %s46 = scalar_select %p45, %s44, 1254
    %s47 = sld [smem:[#allocation5 + $0x4]]
    %p48 = scmp.gt.s32.totalorder %s47, 0
    %s49 = scalar_select %p48, %s47, 0
    %p50 = scmp.lt.s32.totalorder %s49, 1254
    %s51 = scalar_select %p50, %s49, 1254
    %s52 = sld [smem:[#allocation5 + $0x5]]
    %p53 = scmp.gt.s32.totalorder %s52, 0
    %s54 = scalar_select %p53, %s52, 0
    %p55 = scmp.lt.s32.totalorder %s54, 1254
    %s56 = scalar_select %p55, %s54, 1254
    %s57 = sld [smem:[#allocation5 + $0x6]]
    %p58 = scmp.gt.s32.totalorder %s57, 0
    %s59 = scalar_select %p58, %s57, 0
    %p60 = scmp.lt.s32.totalorder %s59, 1254
    %s61 = scalar_select %p60, %s59, 1254
    %s62 = sld [smem:[#allocation5 + $0x7]]
    %p63 = scmp.gt.s32.totalorder %s62, 0
    %s64 = scalar_select %p63, %s62, 0
    %p65 = scmp.lt.s32.totalorder %s64, 1254
    %s66 = scalar_select %p65, %s64, 1254
    %s67 = sshrl.u32 %s31, 3
    %s68 = sand.u32 %s31, 7
    %s69 = smul.u32 %s67, 16
    %s70 = sadd.s32 %s68, %s69
    %s71 = smul.addr %s70, 16
    %s72 = scalar_lea.hbm %s2, %s71
    %s74 = sshll.u32 [#allocation2], 4
    %s75 = int_to_ptr.vmem [resolvable:$true] %s74
    %77 = dma.hbm_to_vmem [thread:$0]  %s72, 32, %s75, [#allocation3], 128, 128, 1
    %s78 = sshrl.u32 %s36, 3
    %s79 = sand.u32 %s36, 7
    %s80 = smul.u32 %s78, 16
    %s81 = sadd.s32 %s79, %s80
    %s82 = smul.addr %s81, 16
    %s83 = scalar_lea.hbm %s2, %s82
    %s84 = scalar_lea.vmem [#allocation2], 1
    %s86 = sshll.u32 %s84, 4
    %s87 = int_to_ptr.vmem [resolvable:$true] %s86
    %89 = dma.hbm_to_vmem [thread:$0]  %s83, 32, %s87, [#allocation3], 128, 128, 1
    %s90 = sshrl.u32 %s41, 3
    %s91 = sand.u32 %s41, 7
    %s92 = smul.u32 %s90, 16
    %s93 = sadd.s32 %s91, %s92
    %s94 = smul.addr %s93, 16
    %s95 = scalar_lea.hbm %s2, %s94
    %s96 = scalar_lea.vmem [#allocation2], 2
    %s98 = sshll.u32 %s96, 4
    %s99 = int_to_ptr.vmem [resolvable:$true] %s98
    %101 = dma.hbm_to_vmem [thread:$0]  %s95, 32, %s99, [#allocation3], 128, 128, 1
    %s102 = sshrl.u32 %s46, 3
    %s103 = sand.u32 %s46, 7
    %s104 = smul.u32 %s102, 16
    %s105 = sadd.s32 %s103, %s104
    %s106 = smul.addr %s105, 16
    %s107 = scalar_lea.hbm %s2, %s106
    %s108 = scalar_lea.vmem [#allocation2], 3
    %s110 = sshll.u32 %s108, 4
    %s111 = int_to_ptr.vmem [resolvable:$true] %s110
    %113 = dma.hbm_to_vmem [thread:$0]  %s107, 32, %s111, [#allocation3], 128, 128, 1
    %s114 = sshrl.u32 %s51, 3
    %s115 = sand.u32 %s51, 7
    %s116 = smul.u32 %s114, 16
    %s117 = sadd.s32 %s115, %s116
    %s118 = smul.addr %s117, 16
    %s119 = scalar_lea.hbm %s2, %s118
    %s120 = scalar_lea.vmem [#allocation2], 4
    %s122 = sshll.u32 %s120, 4
    %s123 = int_to_ptr.vmem [resolvable:$true] %s122
    %125 = dma.hbm_to_vmem [thread:$0]  %s119, 32, %s123, [#allocation3], 128, 128, 1
    %s126 = sshrl.u32 %s56, 3
    %s127 = sand.u32 %s56, 7
    %s128 = smul.u32 %s126, 16
    %s129 = sadd.s32 %s127, %s128
    %s130 = smul.addr %s129, 16
    %s131 = scalar_lea.hbm %s2, %s130
    %s132 = scalar_lea.vmem [#allocation2], 5
    %s134 = sshll.u32 %s132, 4
    %s135 = int_to_ptr.vmem [resolvable:$true] %s134
    %137 = dma.hbm_to_vmem [thread:$0]  %s131, 32, %s135, [#allocation3], 128, 128, 1
    %s138 = sshrl.u32 %s61, 3
    %s139 = sand.u32 %s61, 7
    %s140 = smul.u32 %s138, 16
    %s141 = sadd.s32 %s139, %s140
    %s142 = smul.addr %s141, 16
    %s143 = scalar_lea.hbm %s2, %s142
    %s144 = scalar_lea.vmem [#allocation2], 6
    %s146 = sshll.u32 %s144, 4
    %s147 = int_to_ptr.vmem [resolvable:$true] %s146
    %149 = dma.hbm_to_vmem [thread:$0]  %s143, 32, %s147, [#allocation3], 128, 128, 1
    %s150 = sshrl.u32 %s66, 3
    %s151 = sand.u32 %s66, 7
    %s152 = smul.u32 %s150, 16
    %s153 = sadd.s32 %s151, %s152
    %s154 = smul.addr %s153, 16
    %s155 = scalar_lea.hbm %s2, %s154
    %s156 = scalar_lea.vmem [#allocation2], 7
    %s158 = sshll.u32 %s156, 4
    %s159 = int_to_ptr.vmem [resolvable:$true] %s158
    %161 = dma.hbm_to_vmem [thread:$0]  %s155, 32, %s159, [#allocation3], 128, 128, 1
    %v162 = vld [vmem:[#allocation6] sm:$0xff]
    %v163 = vld [vmem:[#allocation6 + $0x8] sm:$0xff]
    %v164 = vmul.f32 %v162, %v162
    %v165 = vmul.f32 %v163, %v163
    %v166 = vadd.f32 %v164, %v165
    %167 = vadd.xlane.f32.xlu0 %v166
    %v168 = vpop.xlane.xlu0 %167
    %s169 = smul.u32 1, 2
    %s170 = sshll.u32 %s169, 4
    %171 = dma.done [#allocation3], %s170
    %s172 = sshll.u32 %s169, 4
    %173 = dma.done [#allocation3], %s172
    %s174 = sshll.u32 %s169, 4
    %175 = dma.done [#allocation3], %s174
    %s176 = sshll.u32 %s169, 4
    %177 = dma.done [#allocation3], %s176
    %s178 = sshll.u32 %s169, 4
    %179 = dma.done [#allocation3], %s178
    %s180 = sshll.u32 %s169, 4
    %181 = dma.done [#allocation3], %s180
    %s182 = sshll.u32 %s169, 4
    %183 = dma.done [#allocation3], %s182
    %s184 = sshll.u32 %s169, 4
    %185 = dma.done [#allocation3], %s184
    %v186 = vld [vmem:[#allocation2] sm:$0xff]
    %v187 = vld [vmem:[#allocation2 + $0x8] sm:$0xff]
    %v188 = vmul.f32 %v162, %v186
    %v189 = vmul.f32 %v163, %v187
    %v190 = vadd.f32 %v188, %v189
    %191 = vadd.xlane.f32.xlu0 %v190
    %v192 = vpop.xlane.xlu0 %191
    %v193 = vmul.f32 %v186, %v186
    %v194 = vmul.f32 %v187, %v187
    %v195 = vadd.f32 %v193, %v194
    %196 = vadd.xlane.f32.xlu0 %v195
    %v197 = vpop.xlane.xlu0 %196
    %v198 = vmul.f32 %v168, %v197
    %v199 = vmax.f32 %v198, 1e-12
    %v200 = vrsqrt.pop %v199
    %v201 = vmul.f32 %v192, %v200
    %v202 = vsub.f32 1.0, %v201
    %v203 = vmax.f32 %v202, 1e-12
    %v204 = vrot.slane %v203, 4
    %v205 = vadd.f32 %v203, %v204
    %v206 = vrot.slane %v205, 2
    %v207 = vadd.f32 %v205, %v206
    %v208 = vrot.slane %v207, 1
    %v209 = vadd.f32 %v207, %v208
    %v210 = vmul.f32 %v209, 0.125
    %v211 = vadd.f32 %v210, 1.254e-09
    %vm212 = vcmask 0
    %213 = vst.msk [vmem:[#allocation9] sm:$0x1] %vm212, %v211
    // Predicated region
    $region10: #{tpu_custom_call.1} parent=1 // pred_check
      _
    $region11: #{tpu_custom_call.1} parent=1 // pred_check_branch
      %215 = sbr.rel (0) target = $region13
    $region12: #{tpu_custom_call.1} parent=1 // pred_region
      %s217 = ssub.s32 16, 16
      %218 = vsyncadd [#allocation8], %s217
      %s220 = sshll.u32 [#allocation9], 4
      %s221 = int_to_ptr.vmem [resolvable:$true] %s220
      %223 = dma.vmem_to_hbm [thread:$0]  %s221, 16, %s3, [#allocation8]
    $region13: #{tpu_custom_call.1} parent=1 // pred_fallthru
      _
    // Predicated region
    $region14: #{tpu_custom_call.1} parent=1 // pred_check
      _
    $region15: #{tpu_custom_call.1} parent=1 // pred_check_branch
      %225 = sbr.rel (0) target = $region17
    $region16: #{tpu_custom_call.1} parent=1 // pred_region
      %226 = dma.done [#allocation8], 16
    $region17: #{tpu_custom_call.1} parent=1 // pred_fallthru
      _
    %227 = vsyncpa [#allocation7], 1
    %228 = vsyncpa [#allocation8], 1
  %229 = vsyncmov [#allocation3]
  %s230 = vpop.sfrf %229
  %p231 = scmp.eq.s32.totalorder %s230, 0
  %p232 = pneg %p231
  %234 = shalt.err (%p232)

</llo_original>
